<compile_context>
chip_gen: v5e
topology: v5e:2x2
jax: 0.10.0
libtpu: 0.0.40
codegen_flags: <defaults>
</compile_context>

<pallas_src>
import functools

import jax
import jax.numpy as jnp
from jax.experimental import pallas as pl
from jax.experimental.pallas import tpu as pltpu

LANE = 128
SUBLANE = 8


# ----------------------------- Pallas kernel ------------------------------ #
def _mixer_kernel(x_ref, scale_ref, shift_ref, rhs1_ref, bias1_ref, mask1_ref,
                  rhs2_ref, bias2_ref, out_ref, attn1_ref, attn2_ref,
                  *, P, D, TCo, Dp, TCop):
    eps = 1e-8
    x = x_ref[...]                                       # (R, TCp), pad lanes are 0
    # BatchNorm2d (eval mode) folded into a per-(t,c) affine; dropout = identity.
    y = x * scale_ref[...] + shift_ref[...]

    # ---- WeightPool 1: one lane-dense MXU launch gives per-pool mixes + key sims ----
    z1 = jnp.dot(y, rhs1_ref[...], preferred_element_type=jnp.float32)     # (R, P*Dp)
    rs1 = jax.lax.rsqrt(jnp.sum(y * y, axis=-1, keepdims=True) + eps)      # 1/||y||
    sim1 = z1[:, D:D + P] * rs1          # cosine sims in [-1, 1]; no max-shift needed
    e1 = jnp.exp(sim1)
    d1 = jnp.sum(e1, axis=-1, keepdims=True)
    r1 = pl.reciprocal(d1, approx=True)                  # EUP reciprocal ...
    r1 = r1 * (2.0 - d1 * r1)                            # ... + 1 NR step -> f32 accuracy
    attn1 = e1 * r1                                      # (R, P)
    attn1_ref[...] = attn1

    # pooled mix + pooled bias in one pass:  y1 = sum_p attn_p * (y @ W_p^T + b_p)
    y1 = attn1[:, 0:1] * (z1[:, 0:Dp] + bias1_ref[0:1, :])
    for p in range(1, P):                                # static unroll, aligned slices
        y1 = y1 + attn1[:, p:p + 1] * (z1[:, p * Dp:(p + 1) * Dp] + bias1_ref[p:p + 1, :])
    y1 = y1 * mask1_ref[...]             # zero key-contaminated pad lanes D..D+P-1
    y1 = jnp.maximum(y1, 0.0)            # act = ReLU ; dropout = identity

    # ---- WeightPool 2 (same structure) ----
    z2 = jnp.dot(y1, rhs2_ref[...], preferred_element_type=jnp.float32)    # (R, P*TCop)
    rs2 = jax.lax.rsqrt(jnp.sum(y1 * y1, axis=-1, keepdims=True) + eps)
    sim2 = z2[:, TCo:TCo + P] * rs2
    e2 = jnp.exp(sim2)
    d2 = jnp.sum(e2, axis=-1, keepdims=True)
    r2 = pl.reciprocal(d2, approx=True)
    r2 = r2 * (2.0 - d2 * r2)
    attn2 = e2 * r2                                      # (R, P)
    attn2_ref[...] = attn2

    y2 = attn2[:, 0:1] * (z2[:, 0:TCop] + bias2_ref[0:1, :])
    for p in range(1, P):
        y2 = y2 + attn2[:, p:p + 1] * (z2[:, p * TCop:(p + 1) * TCop] + bias2_ref[p:p + 1, :])

    # residual (projection == Identity); contaminated lanes >= TCo sliced off by wrapper.
    out_ref[...] = x + y2                                # lane-dense 128-wide store


# ------------------------------ JAX wrapper -------------------------------- #
def _round_up(n, m):
    return ((n + m - 1) // m) * m


def _pad_last(a, width):
    return jnp.pad(a, [(0, 0)] * (a.ndim - 1) + [(0, width - a.shape[-1])])


def _norm_rows(k):
    return k / jnp.sqrt(jnp.sum(k * k, axis=-1, keepdims=True) + 1e-8)


@jax.jit
def pool_mixer_block(x, params):
    B, C, S, T = x.shape
    P, D, TC = params["wpool1"].shape
    _, TCo, _ = params["wpool2"].shape
    assert TC == T * C and TCo == TC, "requires input_channel == output_channel"

    TCp = _round_up(TC, LANE)      # padded feature width (x / y lanes, rhs1 rows)
    Dp = _round_up(D, LANE)        # padded hidden width  (pool-1 blocks, y1 lanes, rhs2 rows)
    TCop = _round_up(TCo, LANE)    # padded output width  (pool-2 blocks, y2/out lanes)
    # keys are folded into mixing block 0's zero-pad lanes (keeps rhs width = P*128)
    assert D + P <= Dp and TCo + P <= TCop, "no pad lanes available to fold the keys into"

    # Row tiling: grid is a sequential loop on 1-TC chips, so use one tile when the
    # whole problem is small (max MXU M-fill, no per-step overhead); 256-row tiles
    # with row padding otherwise (safe for v7x's 64 MiB VMEM, "parallel" for megacore).
    rows = B * S
    if rows <= 256:
        tile_rows = _round_up(max(rows, SUBLANE), SUBLANE)
    else:
        tile_rows = 256
    rows_pad = _round_up(rows, tile_rows)
    n_tiles = rows_pad // tile_rows

    # rearrange 'b c s t -> (b s) (t c)', pad rows and feature lanes
    x_flat = jnp.transpose(x, (0, 2, 3, 1)).reshape(rows, TC).astype(jnp.float32)
    x_pad = jnp.pad(x_flat, ((0, rows_pad - rows), (0, TCp - TC)))

    # eval-mode BatchNorm2d over the T channel, folded to a per-(t,c) affine (pad = 0)
    bn_eps = 1e-5
    bn_scale = params["gamma"] / jnp.sqrt(params["rvar"] + bn_eps)          # (T,)
    scale_pad = _pad_last(jnp.repeat(bn_scale, C).reshape(1, TC), TCp)
    shift_pad = _pad_last(jnp.repeat(params["beta"] - params["rmean"] * bn_scale, C)
                          .reshape(1, TC), TCp)

    # rhs1: [ W1_0^T | keys1n^T folded in lanes D..D+P-1 | W1_1^T pad | ... ] -> (TCp, P*Dp)
    w1p = params["wpool1"]
    kn1 = _norm_rows(params["keys1"])                                       # (P, TC)
    blk0 = jnp.concatenate([w1p[0].T, kn1.T,
                            jnp.zeros((TC, Dp - D - P), jnp.float32)], axis=1)
    rhs1 = jnp.concatenate([blk0] + [_pad_last(w1p[p].T, Dp) for p in range(1, P)], axis=1)
    rhs1 = jnp.pad(rhs1, ((0, TCp - TC), (0, 0)))

    # rhs2: same structure, keys2 folded in lanes TCo..TCo+P-1 of block 0 -> (Dp, P*TCop)
    w2p = params["wpool2"]
    kn2 = _norm_rows(params["keys2"])                                       # (P, D)
    blk0b = jnp.concatenate([w2p[0].T, kn2.T,
                             jnp.zeros((D, TCop - TCo - P), jnp.float32)], axis=1)
    rhs2 = jnp.concatenate([blk0b] + [_pad_last(w2p[p].T, TCop) for p in range(1, P)], axis=1)
    rhs2 = jnp.pad(rhs2, ((0, Dp - D), (0, 0)))

    bias1 = _pad_last(params["bpool1"], Dp)                                 # (P, Dp)
    bias2 = _pad_last(params["bpool2"], TCop)                               # (P, TCop)
    mask1 = (jnp.arange(Dp) < D).astype(jnp.float32).reshape(1, Dp)         # (1, Dp)

    kernel = functools.partial(_mixer_kernel, P=P, D=D, TCo=TCo, Dp=Dp, TCop=TCop)

    def const_spec(a):
        # grid-resident constants (same block every step); VMEM cost is tiny here, so
        # we skip pipeline_mode single-buffering.
        return pl.BlockSpec(a.shape, lambda i: (0, 0))

    out_pad, attn1_p, attn2_p = pl.pallas_call(
        kernel,
        out_shape=(jax.ShapeDtypeStruct((rows_pad, TCp), jnp.float32),
                   jax.ShapeDtypeStruct((rows_pad, P), jnp.float32),
                   jax.ShapeDtypeStruct((rows_pad, P), jnp.float32)),
        grid=(n_tiles,),
        in_specs=[pl.BlockSpec((tile_rows, TCp), lambda i: (i, 0)),
                  const_spec(scale_pad), const_spec(shift_pad),
                  const_spec(rhs1), const_spec(bias1), const_spec(mask1),
                  const_spec(rhs2), const_spec(bias2)],
        out_specs=(pl.BlockSpec((tile_rows, TCp), lambda i: (i, 0)),
                   pl.BlockSpec((tile_rows, P), lambda i: (i, 0)),
                   pl.BlockSpec((tile_rows, P), lambda i: (i, 0))),
        input_output_aliases={0: 0},    # reuse the x_pad buffer for out_pad
        compiler_params=pltpu.CompilerParams(dimension_semantics=("parallel",)),
    )(x_pad, scale_pad, shift_pad, rhs1, bias1, mask1, rhs2, bias2)

    # w1/w2 reconstructed outside the kernel (tiny XLA matmuls, fuse with consumers);
    # kernel HBM writeback drops ~15x vs storing the full per-row pooled weights.
    attn1 = attn1_p[:rows]
    attn2 = attn2_p[:rows]
    w1 = (attn1 @ w1p.reshape(P, D * TC)).reshape(B, S, D, TC)
    w2 = (attn2 @ w2p.reshape(P, TCo * D)).reshape(B, S, TCo, D)

    # drop padding, rearrange '(b s) (t c) -> b c s t'
    out = jnp.transpose(out_pad[:rows, :TCo].reshape(B, S, TCo // C, C), (0, 3, 1, 2))
    return out, w1, w2


# --------------------------- pure-JAX reference ----------------------------- #
def reference(x, params):
    B, C, S, T = x.shape
    P, D, TC = params["wpool1"].shape
    _, TCo, _ = params["wpool2"].shape
    xp = jnp.transpose(x, (0, 3, 2, 1))                               # (B, T, S, C)
    g, be, rm, rv = params["gamma"], params["beta"], params["rmean"], params["rvar"]
    yn = (xp - rm[None, :, None, None]) / jnp.sqrt(rv[None, :, None, None] + 1e-5)
    yn = yn * g[None, :, None, None] + be[None, :, None, None]
    y = jnp.transpose(yn, (0, 2, 1, 3)).reshape(B, S, T * C)          # 'b t s c -> b s (t c)'

    def pool(v, keys, wpool, bpool):
        vn = v / jnp.sqrt(jnp.sum(v * v, -1, keepdims=True) + 1e-8)
        kn = keys / jnp.sqrt(jnp.sum(keys * keys, -1, keepdims=True) + 1e-8)
        attn = jax.nn.softmax(jnp.einsum("bst,pt->bsp", vn, kn), axis=-1)
        return jnp.einsum("bsp,pot->bsot", attn, wpool), jnp.einsum("bsp,po->bso", attn, bpool)

    w1, b1 = pool(y, params["keys1"], params["wpool1"], params["bpool1"])
    y1 = jnp.maximum(jnp.einsum("bst,bsdt->bsd", y, w1) + b1, 0.0)
    w2, b2 = pool(y1, params["keys2"], params["wpool2"], params["bpool2"])
    y2 = jnp.einsum("bsd,bstd->bst", y1, w2) + b2
    out = jnp.transpose(y2.reshape(B, S, TCo // C, C), (0, 3, 1, 2))  # 'b s (t c) -> b c s t'
    return x + out, w1, w2


# ---------------------------------- main ------------------------------------ #
if __name__ == "__main__":
    # module config: input_channel=8 (== T), hidden=4 (== C), d_model=16,
    # output_channel=8, pool_size=4, num_patches=8 (== S), dropout=0.1, method='cos'
    B, C, S, T = 2, 4, 8, 8
    D, P = 16, 4
    TC = T * C
    TCo = TC  # output_channel * hidden

    key = jax.random.PRNGKey(0)
    ks = jax.random.split(key, 12)
    x = jax.random.normal(ks[0], (B, C, S, T), dtype=jnp.float32)

    params = {
        "gamma": 1.0 + 0.1 * jax.random.normal(ks[1], (T,), jnp.float32),
        "beta": 0.1 * jax.random.normal(ks[2], (T,), jnp.float32),
        "rmean": 0.1 * jax.random.normal(ks[3], (T,), jnp.float32),
        "rvar": 1.0 + 0.1 * jnp.abs(jax.random.normal(ks[4], (T,), jnp.float32)),
        "keys1": jax.random.normal(ks[5], (P, TC), jnp.float32),
        "wpool1": 0.1 * jax.random.normal(ks[6], (P, D, TC), jnp.float32),
        "bpool1": 0.1 * jax.random.normal(ks[7], (P, D), jnp.float32),
        "keys2": jax.random.normal(ks[8], (P, D), jnp.float32),
        "wpool2": 0.1 * jax.random.normal(ks[9], (P, TCo, D), jnp.float32),
        "bpool2": 0.1 * jax.random.normal(ks[10], (P, TCo), jnp.float32),
    }

    out, w1, w2 = pool_mixer_block(x, params)
    jax.block_until_ready((out, w1, w2))

    ro, rw1, rw2 = reference(x, params)
    assert jnp.allclose(out, ro, atol=1e-4, rtol=1e-4), "output mismatch"
    assert jnp.allclose(w1, rw1, atol=1e-4, rtol=1e-4), "w1 mismatch"
    assert jnp.allclose(w2, rw2, atol=1e-4, rtol=1e-4), "w2 mismatch"

    print("KERNEL_OK")
</pallas_src>

<mosaic_0001>
module attributes {stable_mosaic.version = 11 : i64} {
  func.func @_mixer_kernel(%arg0: i32, %arg1: memref<16x128xf32, #tpu.memory_space<vmem>>, %arg2: memref<1x128xf32, #tpu.memory_space<vmem>>, %arg3: memref<1x128xf32, #tpu.memory_space<vmem>>, %arg4: memref<128x512xf32, #tpu.memory_space<vmem>>, %arg5: memref<4x128xf32, #tpu.memory_space<vmem>>, %arg6: memref<1x128xf32, #tpu.memory_space<vmem>>, %arg7: memref<128x512xf32, #tpu.memory_space<vmem>>, %arg8: memref<4x128xf32, #tpu.memory_space<vmem>>, %arg9: memref<16x128xf32, #tpu.memory_space<vmem>>, %arg10: memref<16x4xf32, #tpu.memory_space<vmem>>, %arg11: memref<16x4xf32, #tpu.memory_space<vmem>>) attributes {dimension_semantics = [#tpu.dimension_semantics<parallel>], iteration_bounds = array<i64: 1>, scalar_prefetch = 0 : i64, scratch_operands = 0 : i64, tpu.core_type = #tpu.core_type<tc>, window_params = [{transform_indices = @transform_0, window_bounds = array<i64: 16, 128>}, {pipeline_mode = #tpu.pipeline_mode<synchronous>, transform_indices = @transform_1, window_bounds = array<i64: 1, 128>}, {pipeline_mode = #tpu.pipeline_mode<synchronous>, transform_indices = @transform_2, window_bounds = array<i64: 1, 128>}, {pipeline_mode = #tpu.pipeline_mode<synchronous>, transform_indices = @transform_3, window_bounds = array<i64: 128, 512>}, {pipeline_mode = #tpu.pipeline_mode<synchronous>, transform_indices = @transform_4, window_bounds = array<i64: 4, 128>}, {pipeline_mode = #tpu.pipeline_mode<synchronous>, transform_indices = @transform_5, window_bounds = array<i64: 1, 128>}, {pipeline_mode = #tpu.pipeline_mode<synchronous>, transform_indices = @transform_6, window_bounds = array<i64: 128, 512>}, {pipeline_mode = #tpu.pipeline_mode<synchronous>, transform_indices = @transform_7, window_bounds = array<i64: 4, 128>}, {transform_indices = @transform_8, window_bounds = array<i64: 16, 128>}, {transform_indices = @transform_9, window_bounds = array<i64: 16, 4>}, {transform_indices = @transform_10, window_bounds = array<i64: 16, 4>}]} {
    %c0 = arith.constant 0 : index
    %c0_0 = arith.constant 0 : index
    %0 = vector.load %arg1[%c0, %c0_0] : memref<16x128xf32, #tpu.memory_space<vmem>>, vector<16x128xf32>
    %c0_1 = arith.constant 0 : index
    %c0_2 = arith.constant 0 : index
    %1 = vector.load %arg2[%c0_1, %c0_2] : memref<1x128xf32, #tpu.memory_space<vmem>>, vector<1x128xf32>
    %2 = vector.broadcast %1 : vector<1x128xf32> to vector<16x128xf32>
    %3 = arith.mulf %0, %2 : vector<16x128xf32>
    %c0_3 = arith.constant 0 : index
    %c0_4 = arith.constant 0 : index
    %4 = vector.load %arg3[%c0_3, %c0_4] : memref<1x128xf32, #tpu.memory_space<vmem>>, vector<1x128xf32>
    %5 = vector.broadcast %4 : vector<1x128xf32> to vector<16x128xf32>
    %6 = arith.addf %3, %5 : vector<16x128xf32>
    %c0_5 = arith.constant 0 : index
    %c0_6 = arith.constant 0 : index
    %7 = vector.load %arg4[%c0_5, %c0_6] : memref<128x512xf32, #tpu.memory_space<vmem>>, vector<128x512xf32>
    %cst = arith.constant dense<0.000000e+00> : vector<16x512xf32>
    %8 = tpu.matmul %6, %7, %cst {dimension_numbers = #tpu.dot_dimension_numbers<[1], [0], [0], [1], [0, 0, 1, 1], [], []>} : vector<16x128xf32>, vector<128x512xf32>, vector<16x512xf32> -> vector<16x512xf32>
    %9 = arith.mulf %6, %6 : vector<16x128xf32>
    %cst_7 = arith.constant dense<0.000000e+00> : vector<16xf32>
    %10 = vector.multi_reduction <add>, %9, %cst_7 [1] : vector<16x128xf32> to vector<16xf32>
    %11 = vector.shape_cast %10 : vector<16xf32> to vector<16x1xf32>
    %cst_8 = arith.constant 9.99999993E-9 : f32
    %12 = vector.broadcast %cst_8 : f32 to vector<16x1xf32>
    %13 = arith.addf %11, %12 : vector<16x1xf32>
    %14 = math.rsqrt %13 : vector<16x1xf32>
    %15 = vector.extract_strided_slice %8 {offsets = [0, 16], sizes = [16, 4], strides = [1, 1]} : vector<16x512xf32> to vector<16x4xf32>
    %16 = vector.broadcast %14 : vector<16x1xf32> to vector<16x4xf32>
    %17 = arith.mulf %15, %16 : vector<16x4xf32>
    %18 = math.exp %17 : vector<16x4xf32>
    %cst_9 = arith.constant dense<0.000000e+00> : vector<16xf32>
    %19 = vector.multi_reduction <add>, %18, %cst_9 [1] : vector<16x4xf32> to vector<16xf32>
    %20 = vector.shape_cast %19 : vector<16xf32> to vector<16x1xf32>
    %21 = tpu.reciprocal %20 {approx = true} : vector<16x1xf32> -> vector<16x1xf32>
    %22 = arith.mulf %20, %21 : vector<16x1xf32>
    %cst_10 = arith.constant 2.000000e+00 : f32
    %23 = vector.broadcast %cst_10 : f32 to vector<16x1xf32>
    %24 = arith.subf %23, %22 : vector<16x1xf32>
    %25 = arith.mulf %21, %24 : vector<16x1xf32>
    %26 = vector.broadcast %25 : vector<16x1xf32> to vector<16x4xf32>
    %27 = arith.mulf %18, %26 : vector<16x4xf32>
    %c0_11 = arith.constant 0 : index
    %c0_12 = arith.constant 0 : index
    %28 = vector.load %arg10[%c0_11, %c0_12] : memref<16x4xf32, #tpu.memory_space<vmem>>, vector<16x4xf32>
    tpu.vector_store %arg10[%c0_11, %c0_12], %27 {strides = array<i32>} : memref<16x4xf32, #tpu.memory_space<vmem>>, vector<16x4xf32>,
    %29 = vector.extract_strided_slice %27 {offsets = [0, 0], sizes = [16, 1], strides = [1, 1]} : vector<16x4xf32> to vector<16x1xf32>
    %30 = vector.extract_strided_slice %8 {offsets = [0, 0], sizes = [16, 128], strides = [1, 1]} : vector<16x512xf32> to vector<16x128xf32>
    %c0_13 = arith.constant 0 : index
    %c0_14 = arith.constant 0 : index
    %31 = vector.load %arg5[%c0_13, %c0_14] : memref<4x128xf32, #tpu.memory_space<vmem>>, vector<1x128xf32>
    %32 = vector.broadcast %31 : vector<1x128xf32> to vector<16x128xf32>
    %33 = arith.addf %30, %32 : vector<16x128xf32>
    %34 = vector.broadcast %29 : vector<16x1xf32> to vector<16x128xf32>
    %35 = arith.mulf %34, %33 : vector<16x128xf32>
    %36 = vector.extract_strided_slice %27 {offsets = [0, 1], sizes = [16, 1], strides = [1, 1]} : vector<16x4xf32> to vector<16x1xf32>
    %37 = vector.extract_strided_slice %8 {offsets = [0, 128], sizes = [16, 128], strides = [1, 1]} : vector<16x512xf32> to vector<16x128xf32>
    %c1 = arith.constant 1 : index
    %c0_15 = arith.constant 0 : index
    %38 = vector.load %arg5[%c1, %c0_15] : memref<4x128xf32, #tpu.memory_space<vmem>>, vector<1x128xf32>
    %39 = vector.broadcast %38 : vector<1x128xf32> to vector<16x128xf32>
    %40 = arith.addf %37, %39 : vector<16x128xf32>
    %41 = vector.broadcast %36 : vector<16x1xf32> to vector<16x128xf32>
    %42 = arith.mulf %41, %40 : vector<16x128xf32>
    %43 = arith.addf %35, %42 : vector<16x128xf32>
    %44 = vector.extract_strided_slice %27 {offsets = [0, 2], sizes = [16, 1], strides = [1, 1]} : vector<16x4xf32> to vector<16x1xf32>
    %45 = vector.extract_strided_slice %8 {offsets = [0, 256], sizes = [16, 128], strides = [1, 1]} : vector<16x512xf32> to vector<16x128xf32>
    %c2 = arith.constant 2 : index
    %c0_16 = arith.constant 0 : index
    %46 = vector.load %arg5[%c2, %c0_16] : memref<4x128xf32, #tpu.memory_space<vmem>>, vector<1x128xf32>
    %47 = vector.broadcast %46 : vector<1x128xf32> to vector<16x128xf32>
    %48 = arith.addf %45, %47 : vector<16x128xf32>
    %49 = vector.broadcast %44 : vector<16x1xf32> to vector<16x128xf32>
    %50 = arith.mulf %49, %48 : vector<16x128xf32>
    %51 = arith.addf %43, %50 : vector<16x128xf32>
    %52 = vector.extract_strided_slice %27 {offsets = [0, 3], sizes = [16, 1], strides = [1, 1]} : vector<16x4xf32> to vector<16x1xf32>
    %53 = vector.extract_strided_slice %8 {offsets = [0, 384], sizes = [16, 128], strides = [1, 1]} : vector<16x512xf32> to vector<16x128xf32>
    %c3 = arith.constant 3 : index
    %c0_17 = arith.constant 0 : index
    %54 = vector.load %arg5[%c3, %c0_17] : memref<4x128xf32, #tpu.memory_space<vmem>>, vector<1x128xf32>
    %55 = vector.broadcast %54 : vector<1x128xf32> to vector<16x128xf32>
    %56 = arith.addf %53, %55 : vector<16x128xf32>
    %57 = vector.broadcast %52 : vector<16x1xf32> to vector<16x128xf32>
    %58 = arith.mulf %57, %56 : vector<16x128xf32>
    %59 = arith.addf %51, %58 : vector<16x128xf32>
    %c0_18 = arith.constant 0 : index
    %c0_19 = arith.constant 0 : index
    %60 = vector.load %arg6[%c0_18, %c0_19] : memref<1x128xf32, #tpu.memory_space<vmem>>, vector<1x128xf32>
    %61 = vector.broadcast %60 : vector<1x128xf32> to vector<16x128xf32>
    %62 = arith.mulf %59, %61 : vector<16x128xf32>
    %cst_20 = arith.constant 0.000000e+00 : f32
    %63 = vector.broadcast %cst_20 : f32 to vector<16x128xf32>
    %64 = arith.maximumf %62, %63 : vector<16x128xf32>
    %c0_21 = arith.constant 0 : index
    %c0_22 = arith.constant 0 : index
    %65 = vector.load %arg7[%c0_21, %c0_22] : memref<128x512xf32, #tpu.memory_space<vmem>>, vector<128x512xf32>
    %cst_23 = arith.constant dense<0.000000e+00> : vector<16x512xf32>
    %66 = tpu.matmul %64, %65, %cst_23 {dimension_numbers = #tpu.dot_dimension_numbers<[1], [0], [0], [1], [0, 0, 1, 1], [], []>} : vector<16x128xf32>, vector<128x512xf32>, vector<16x512xf32> -> vector<16x512xf32>
    %67 = arith.mulf %64, %64 : vector<16x128xf32>
    %cst_24 = arith.constant dense<0.000000e+00> : vector<16xf32>
    %68 = vector.multi_reduction <add>, %67, %cst_24 [1] : vector<16x128xf32> to vector<16xf32>
    %69 = vector.shape_cast %68 : vector<16xf32> to vector<16x1xf32>
    %cst_25 = arith.constant 9.99999993E-9 : f32
    %70 = vector.broadcast %cst_25 : f32 to vector<16x1xf32>
    %71 = arith.addf %69, %70 : vector<16x1xf32>
    %72 = math.rsqrt %71 : vector<16x1xf32>
    %73 = vector.extract_strided_slice %66 {offsets = [0, 32], sizes = [16, 4], strides = [1, 1]} : vector<16x512xf32> to vector<16x4xf32>
    %74 = vector.broadcast %72 : vector<16x1xf32> to vector<16x4xf32>
    %75 = arith.mulf %73, %74 : vector<16x4xf32>
    %76 = math.exp %75 : vector<16x4xf32>
    %cst_26 = arith.constant dense<0.000000e+00> : vector<16xf32>
    %77 = vector.multi_reduction <add>, %76, %cst_26 [1] : vector<16x4xf32> to vector<16xf32>
    %78 = vector.shape_cast %77 : vector<16xf32> to vector<16x1xf32>
    %79 = tpu.reciprocal %78 {approx = true} : vector<16x1xf32> -> vector<16x1xf32>
    %80 = arith.mulf %78, %79 : vector<16x1xf32>
    %cst_27 = arith.constant 2.000000e+00 : f32
    %81 = vector.broadcast %cst_27 : f32 to vector<16x1xf32>
    %82 = arith.subf %81, %80 : vector<16x1xf32>
    %83 = arith.mulf %79, %82 : vector<16x1xf32>
    %84 = vector.broadcast %83 : vector<16x1xf32> to vector<16x4xf32>
    %85 = arith.mulf %76, %84 : vector<16x4xf32>
    %c0_28 = arith.constant 0 : index
    %c0_29 = arith.constant 0 : index
    %86 = vector.load %arg11[%c0_28, %c0_29] : memref<16x4xf32, #tpu.memory_space<vmem>>, vector<16x4xf32>
    tpu.vector_store %arg11[%c0_28, %c0_29], %85 {strides = array<i32>} : memref<16x4xf32, #tpu.memory_space<vmem>>, vector<16x4xf32>,
    %87 = vector.extract_strided_slice %85 {offsets = [0, 0], sizes = [16, 1], strides = [1, 1]} : vector<16x4xf32> to vector<16x1xf32>
    %88 = vector.extract_strided_slice %66 {offsets = [0, 0], sizes = [16, 128], strides = [1, 1]} : vector<16x512xf32> to vector<16x128xf32>
    %c0_30 = arith.constant 0 : index
    %c0_31 = arith.constant 0 : index
    %89 = vector.load %arg8[%c0_30, %c0_31] : memref<4x128xf32, #tpu.memory_space<vmem>>, vector<1x128xf32>
    %90 = vector.broadcast %89 : vector<1x128xf32> to vector<16x128xf32>
    %91 = arith.addf %88, %90 : vector<16x128xf32>
    %92 = vector.broadcast %87 : vector<16x1xf32> to vector<16x128xf32>
    %93 = arith.mulf %92, %91 : vector<16x128xf32>
    %94 = vector.extract_strided_slice %85 {offsets = [0, 1], sizes = [16, 1], strides = [1, 1]} : vector<16x4xf32> to vector<16x1xf32>
    %95 = vector.extract_strided_slice %66 {offsets = [0, 128], sizes = [16, 128], strides = [1, 1]} : vector<16x512xf32> to vector<16x128xf32>
    %c1_32 = arith.constant 1 : index
    %c0_33 = arith.constant 0 : index
    %96 = vector.load %arg8[%c1_32, %c0_33] : memref<4x128xf32, #tpu.memory_space<vmem>>, vector<1x128xf32>
    %97 = vector.broadcast %96 : vector<1x128xf32> to vector<16x128xf32>
    %98 = arith.addf %95, %97 : vector<16x128xf32>
    %99 = vector.broadcast %94 : vector<16x1xf32> to vector<16x128xf32>
    %100 = arith.mulf %99, %98 : vector<16x128xf32>
    %101 = arith.addf %93, %100 : vector<16x128xf32>
    %102 = vector.extract_strided_slice %85 {offsets = [0, 2], sizes = [16, 1], strides = [1, 1]} : vector<16x4xf32> to vector<16x1xf32>
    %103 = vector.extract_strided_slice %66 {offsets = [0, 256], sizes = [16, 128], strides = [1, 1]} : vector<16x512xf32> to vector<16x128xf32>
    %c2_34 = arith.constant 2 : index
    %c0_35 = arith.constant 0 : index
    %104 = vector.load %arg8[%c2_34, %c0_35] : memref<4x128xf32, #tpu.memory_space<vmem>>, vector<1x128xf32>
    %105 = vector.broadcast %104 : vector<1x128xf32> to vector<16x128xf32>
    %106 = arith.addf %103, %105 : vector<16x128xf32>
    %107 = vector.broadcast %102 : vector<16x1xf32> to vector<16x128xf32>
    %108 = arith.mulf %107, %106 : vector<16x128xf32>
    %109 = arith.addf %101, %108 : vector<16x128xf32>
    %110 = vector.extract_strided_slice %85 {offsets = [0, 3], sizes = [16, 1], strides = [1, 1]} : vector<16x4xf32> to vector<16x1xf32>
    %111 = vector.extract_strided_slice %66 {offsets = [0, 384], sizes = [16, 128], strides = [1, 1]} : vector<16x512xf32> to vector<16x128xf32>
    %c3_36 = arith.constant 3 : index
    %c0_37 = arith.constant 0 : index
    %112 = vector.load %arg8[%c3_36, %c0_37] : memref<4x128xf32, #tpu.memory_space<vmem>>, vector<1x128xf32>
    %113 = vector.broadcast %112 : vector<1x128xf32> to vector<16x128xf32>
    %114 = arith.addf %111, %113 : vector<16x128xf32>
    %115 = vector.broadcast %110 : vector<16x1xf32> to vector<16x128xf32>
    %116 = arith.mulf %115, %114 : vector<16x128xf32>
    %117 = arith.addf %109, %116 : vector<16x128xf32>
    %118 = arith.addf %0, %117 : vector<16x128xf32>
    %c0_38 = arith.constant 0 : index
    %c0_39 = arith.constant 0 : index
    %119 = vector.load %arg9[%c0_38, %c0_39] : memref<16x128xf32, #tpu.memory_space<vmem>>, vector<16x128xf32>
    tpu.vector_store %arg9[%c0_38, %c0_39], %118 {strides = array<i32>} : memref<16x128xf32, #tpu.memory_space<vmem>>, vector<16x128xf32>,
    return
  }
  func.func @transform_0(%arg0: i32) -> (i32, i32) {
    %c0_i32 = arith.constant 0 : i32
    %c0_i32_0 = arith.constant 0 : i32
    return %arg0, %c0_i32 : i32, i32
  }
  func.func @transform_1(%arg0: i32) -> (i32, i32) {
    %c0_i32 = arith.constant 0 : i32
    %c0_i32_0 = arith.constant 0 : i32
    %c0_i32_1 = arith.constant 0 : i32
    return %c0_i32, %c0_i32_0 : i32, i32
  }
  func.func @transform_2(%arg0: i32) -> (i32, i32) {
    %c0_i32 = arith.constant 0 : i32
    %c0_i32_0 = arith.constant 0 : i32
    %c0_i32_1 = arith.constant 0 : i32
    return %c0_i32, %c0_i32_0 : i32, i32
  }
  func.func @transform_3(%arg0: i32) -> (i32, i32) {
    %c0_i32 = arith.constant 0 : i32
    %c0_i32_0 = arith.constant 0 : i32
    %c0_i32_1 = arith.constant 0 : i32
    return %c0_i32, %c0_i32_0 : i32, i32
  }
  func.func @transform_4(%arg0: i32) -> (i32, i32) {
    %c0_i32 = arith.constant 0 : i32
    %c0_i32_0 = arith.constant 0 : i32
    %c0_i32_1 = arith.constant 0 : i32
    return %c0_i32, %c0_i32_0 : i32, i32
  }
  func.func @transform_5(%arg0: i32) -> (i32, i32) {
    %c0_i32 = arith.constant 0 : i32
    %c0_i32_0 = arith.constant 0 : i32
    %c0_i32_1 = arith.constant 0 : i32
    return %c0_i32, %c0_i32_0 : i32, i32
  }
  func.func @transform_6(%arg0: i32) -> (i32, i32) {
    %c0_i32 = arith.constant 0 : i32
    %c0_i32_0 = arith.constant 0 : i32
    %c0_i32_1 = arith.constant 0 : i32
    return %c0_i32, %c0_i32_0 : i32, i32
  }
  func.func @transform_7(%arg0: i32) -> (i32, i32) {
    %c0_i32 = arith.constant 0 : i32
    %c0_i32_0 = arith.constant 0 : i32
    %c0_i32_1 = arith.constant 0 : i32
    return %c0_i32, %c0_i32_0 : i32, i32
  }
  func.func @transform_8(%arg0: i32) -> (i32, i32) {
    %c0_i32 = arith.constant 0 : i32
    %c0_i32_0 = arith.constant 0 : i32
    return %arg0, %c0_i32 : i32, i32
  }
  func.func @transform_9(%arg0: i32) -> (i32, i32) {
    %c0_i32 = arith.constant 0 : i32
    %c0_i32_0 = arith.constant 0 : i32
    return %arg0, %c0_i32 : i32, i32
  }
  func.func @transform_10(%arg0: i32) -> (i32, i32) {
    %c0_i32 = arith.constant 0 : i32
    %c0_i32_0 = arith.constant 0 : i32
    return %arg0, %c0_i32 : i32, i32
  }
}

</mosaic_0001>

<llo_original>
// kernel: pool_mixer_block.1
$region0: #{pool_mixer_block.1}
  #allocation0 [shape = 'u32[]', space=smem, size = 0x4, offset = 0x4, fixed_abs, tag = 'smem constant byte address 0x4 - core index']
  #allocation1 [shape = 'u32[72,128]{1,0:T(1,128)}', space=vmem, size = 0x9000, scoped, tag = 'internal scratch']
  %s0 = inlined_call_operand.vmem [shape: f32[16,128], index: 0, kind: input, shape index: {}, may-alias: {0,8}]
  %s1 = inlined_call_operand.vmem [shape: f32[1,128], index: 1, kind: input, shape index: {}]
  %s2 = inlined_call_operand.vmem [shape: f32[1,128], index: 2, kind: input, shape index: {}]
  %s3 = inlined_call_operand.vmem [shape: f32[128,512], index: 3, kind: input, shape index: {}]
  %s4 = inlined_call_operand.vmem [shape: f32[4,128], index: 4, kind: input, shape index: {}]
  %s5 = inlined_call_operand.vmem [shape: f32[1,128], index: 5, kind: input, shape index: {}]
  %s6 = inlined_call_operand.vmem [shape: f32[128,512], index: 6, kind: input, shape index: {}]
  %s7 = inlined_call_operand.vmem [shape: f32[4,128], index: 7, kind: input, shape index: {}]
  %s8 = inlined_call_operand.vmem [shape: f32[16,128], index: 8, kind: output, shape index: {0}, may-alias: {0,8}]
  %s9 = inlined_call_operand.vmem [shape: f32[16,4], index: 9, kind: output, shape index: {1}]
  %s10 = inlined_call_operand.vmem [shape: f32[16,4], index: 10, kind: output, shape index: {2}]
  %11 = xla_tuple %s8, %s9, %s10
  %s12 = sld [smem:[#allocation0]]
  $region58: #{pool_mixer_block.1} parent=0
    _
  %s14 = ssub.s32 1, %s12
  %s15 = scalar_select 0, %s14, %s12
  // Predicated region
  $region2: #{pool_mixer_block.1} parent=0 // pred_check
    _
  $region3: #{pool_mixer_block.1} parent=0 // pred_check_branch
    %17 = sbr.rel (0) target = $region5
  $region4: #{pool_mixer_block.1} parent=0 // pred_region
    _
  $region5: #{pool_mixer_block.1} parent=0 // pred_fallthru
    _
  // Predicated region
  $region6: #{pool_mixer_block.1} parent=0 // pred_check
    _
  $region7: #{pool_mixer_block.1} parent=0 // pred_check_branch
    %19 = sbr.rel (0) target = $region9
  $region8: #{pool_mixer_block.1} parent=0 // pred_region
    _
  $region9: #{pool_mixer_block.1} parent=0 // pred_fallthru
    _
  // Predicated region
  $region10: #{pool_mixer_block.1} parent=0 // pred_check
    _
  $region11: #{pool_mixer_block.1} parent=0 // pred_check_branch
    %21 = sbr.rel (0) target = $region13
  $region12: #{pool_mixer_block.1} parent=0 // pred_region
    _
  $region13: #{pool_mixer_block.1} parent=0 // pred_fallthru
    _
  // Predicated region
  $region14: #{pool_mixer_block.1} parent=0 // pred_check
    _
  $region15: #{pool_mixer_block.1} parent=0 // pred_check_branch
    %23 = sbr.rel (0) target = $region17
  $region16: #{pool_mixer_block.1} parent=0 // pred_region
    _
  $region17: #{pool_mixer_block.1} parent=0 // pred_fallthru
    _
  // Predicated region
  $region18: #{pool_mixer_block.1} parent=0 // pred_check
    _
  $region19: #{pool_mixer_block.1} parent=0 // pred_check_branch
    %25 = sbr.rel (0) target = $region21
  $region20: #{pool_mixer_block.1} parent=0 // pred_region
    _
  $region21: #{pool_mixer_block.1} parent=0 // pred_fallthru
    _
  // Predicated region
  $region22: #{pool_mixer_block.1} parent=0 // pred_check
    _
  $region23: #{pool_mixer_block.1} parent=0 // pred_check_branch
    %27 = sbr.rel (0) target = $region25
  $region24: #{pool_mixer_block.1} parent=0 // pred_region
    _
  $region25: #{pool_mixer_block.1} parent=0 // pred_fallthru
    _
  // Predicated region
  $region26: #{pool_mixer_block.1} parent=0 // pred_check
    _
  $region27: #{pool_mixer_block.1} parent=0 // pred_check_branch
    %29 = sbr.rel (0) target = $region29
  $region28: #{pool_mixer_block.1} parent=0 // pred_region
    _
  $region29: #{pool_mixer_block.1} parent=0 // pred_fallthru
    _
  // Predicated region
  $region30: #{pool_mixer_block.1} parent=0 // pred_check
    _
  $region31: #{pool_mixer_block.1} parent=0 // pred_check_branch
    %31 = sbr.rel (0) target = $region33
  $region32: #{pool_mixer_block.1} parent=0 // pred_region
    _
  $region33: #{pool_mixer_block.1} parent=0 // pred_fallthru
    _
  %v32 = vld [vmem:[%s0] sm:$0xff]
  %v33 = vld [vmem:[%s0 + $0x8] sm:$0xff]
  %v34 = vld [vmem:[%s1] sm:$0x1]
  %v36 = vperm.slane %v34, 0
  %v38 = vmul.f32 %v32, %v36
  %v39 = vmul.f32 %v33, %v36
  %v40 = vld [vmem:[%s2] sm:$0x1]
  %v42 = vperm.slane %v40, 0
  %v44 = vadd.f32 %v38, %v42
  %v45 = vadd.f32 %v39, %v42
  %v46 = vld [vmem:[%s3] sm:$0xff]
  %v47 = vld [vmem:[%s3 + $0x8] sm:$0xff]
  %v48 = vld [vmem:[%s3 + $0x10] sm:$0xff]
  %v49 = vld [vmem:[%s3 + $0x18] sm:$0xff]
  %v50 = vld [vmem:[%s3 + $0x20] sm:$0xff]
  %v51 = vld [vmem:[%s3 + $0x28] sm:$0xff]
  %v52 = vld [vmem:[%s3 + $0x30] sm:$0xff]
  %v53 = vld [vmem:[%s3 + $0x38] sm:$0xff]
  %v54 = vld [vmem:[%s3 + $0x40] sm:$0xff]
  %v55 = vld [vmem:[%s3 + $0x48] sm:$0xff]
  %v56 = vld [vmem:[%s3 + $0x50] sm:$0xff]
  %v57 = vld [vmem:[%s3 + $0x58] sm:$0xff]
  %v58 = vld [vmem:[%s3 + $0x60] sm:$0xff]
  %v59 = vld [vmem:[%s3 + $0x68] sm:$0xff]
  %v60 = vld [vmem:[%s3 + $0x70] sm:$0xff]
  %v61 = vld [vmem:[%s3 + $0x78] sm:$0xff]
  %v62 = vld [vmem:[%s3 + $0x80] sm:$0xff]
  %v63 = vld [vmem:[%s3 + $0x88] sm:$0xff]
  %v64 = vld [vmem:[%s3 + $0x90] sm:$0xff]
  %v65 = vld [vmem:[%s3 + $0x98] sm:$0xff]
  %v66 = vld [vmem:[%s3 + $0xa0] sm:$0xff]
  %v67 = vld [vmem:[%s3 + $0xa8] sm:$0xff]
  %v68 = vld [vmem:[%s3 + $0xb0] sm:$0xff]
  %v69 = vld [vmem:[%s3 + $0xb8] sm:$0xff]
  %v70 = vld [vmem:[%s3 + $0xc0] sm:$0xff]
  %v71 = vld [vmem:[%s3 + $0xc8] sm:$0xff]
  %v72 = vld [vmem:[%s3 + $0xd0] sm:$0xff]
  %v73 = vld [vmem:[%s3 + $0xd8] sm:$0xff]
  %v74 = vld [vmem:[%s3 + $0xe0] sm:$0xff]
  %v75 = vld [vmem:[%s3 + $0xe8] sm:$0xff]
  %v76 = vld [vmem:[%s3 + $0xf0] sm:$0xff]
  %v77 = vld [vmem:[%s3 + $0xf8] sm:$0xff]
  %v78 = vld [vmem:[%s3 + $0x100] sm:$0xff]
  %v79 = vld [vmem:[%s3 + $0x108] sm:$0xff]
  %v80 = vld [vmem:[%s3 + $0x110] sm:$0xff]
  %v81 = vld [vmem:[%s3 + $0x118] sm:$0xff]
  %v82 = vld [vmem:[%s3 + $0x120] sm:$0xff]
  %v83 = vld [vmem:[%s3 + $0x128] sm:$0xff]
  %v84 = vld [vmem:[%s3 + $0x130] sm:$0xff]
  %v85 = vld [vmem:[%s3 + $0x138] sm:$0xff]
  %v86 = vld [vmem:[%s3 + $0x140] sm:$0xff]
  %v87 = vld [vmem:[%s3 + $0x148] sm:$0xff]
  %v88 = vld [vmem:[%s3 + $0x150] sm:$0xff]
  %v89 = vld [vmem:[%s3 + $0x158] sm:$0xff]
  %v90 = vld [vmem:[%s3 + $0x160] sm:$0xff]
  %v91 = vld [vmem:[%s3 + $0x168] sm:$0xff]
  %v92 = vld [vmem:[%s3 + $0x170] sm:$0xff]
  %v93 = vld [vmem:[%s3 + $0x178] sm:$0xff]
  %v94 = vld [vmem:[%s3 + $0x180] sm:$0xff]
  %v95 = vld [vmem:[%s3 + $0x188] sm:$0xff]
  %v96 = vld [vmem:[%s3 + $0x190] sm:$0xff]
  %v97 = vld [vmem:[%s3 + $0x198] sm:$0xff]
  %v98 = vld [vmem:[%s3 + $0x1a0] sm:$0xff]
  %v99 = vld [vmem:[%s3 + $0x1a8] sm:$0xff]
  %v100 = vld [vmem:[%s3 + $0x1b0] sm:$0xff]
  %v101 = vld [vmem:[%s3 + $0x1b8] sm:$0xff]
  %v102 = vld [vmem:[%s3 + $0x1c0] sm:$0xff]
  %v103 = vld [vmem:[%s3 + $0x1c8] sm:$0xff]
  %v104 = vld [vmem:[%s3 + $0x1d0] sm:$0xff]
  %v105 = vld [vmem:[%s3 + $0x1d8] sm:$0xff]
  %v106 = vld [vmem:[%s3 + $0x1e0] sm:$0xff]
  %v107 = vld [vmem:[%s3 + $0x1e8] sm:$0xff]
  %v108 = vld [vmem:[%s3 + $0x1f0] sm:$0xff]
  %v109 = vld [vmem:[%s3 + $0x1f8] sm:$0xff]
  %110 = vmatpush.msra.mxu0 %v106
  %111 = vmatpush.msra.mxu0 %v102
  %112 = vmatpush.msra.mxu0 %v98
  %113 = vmatpush.msra.mxu0 %v94
  %114 = vmatpush.msra.mxu0 %v90
  %115 = vmatpush.msra.mxu0 %v86
  %116 = vmatpush.msra.mxu0 %v82
  %117 = vmatpush.msra.mxu0 %v78
  %118 = vmatpush.msra.mxu0 %v74
  %119 = vmatpush.msra.mxu0 %v70
  %120 = vmatpush.msra.mxu0 %v66
  %121 = vmatpush.msra.mxu0 %v62
  %122 = vmatpush.msra.mxu0 %v58
  %123 = vmatpush.msra.mxu0 %v54
  %124 = vmatpush.msra.mxu0 %v50
  %125 = vmatpush.msra.mxu0 %v46
  %126 = vmatmul.f32.gmra.mxu0 %v44
  %v127 = vpop.f32.mrf.mxu0
  %v128 = vadd.f32 0.0, %v127
  %129 = vmatmul.f32.gmra.mxu0 %v45
  %v130 = vpop.f32.mrf.mxu0
  %v131 = vadd.f32 0.0, %v130
  %132 = vdwg.mxu0
  %133 = vmatpush.msra.mxu0 %v107
  %134 = vmatpush.msra.mxu0 %v103
  %135 = vmatpush.msra.mxu0 %v99
  %136 = vmatpush.msra.mxu0 %v95
  %137 = vmatpush.msra.mxu0 %v91
  %138 = vmatpush.msra.mxu0 %v87
  %139 = vmatpush.msra.mxu0 %v83
  %140 = vmatpush.msra.mxu0 %v79
  %141 = vmatpush.msra.mxu0 %v75
  %142 = vmatpush.msra.mxu0 %v71
  %143 = vmatpush.msra.mxu0 %v67
  %144 = vmatpush.msra.mxu0 %v63
  %145 = vmatpush.msra.mxu0 %v59
  %146 = vmatpush.msra.mxu0 %v55
  %147 = vmatpush.msra.mxu0 %v51
  %148 = vmatpush.msra.mxu0 %v47
  %149 = vmatmul.f32.gmra.mxu0 %v44
  %v150 = vpop.f32.mrf.mxu0
  %v151 = vadd.f32 0.0, %v150
  %152 = vmatmul.f32.gmra.mxu0 %v45
  %v153 = vpop.f32.mrf.mxu0
  %v154 = vadd.f32 0.0, %v153
  %155 = vdwg.mxu0
  %156 = vmatpush.msra.mxu0 %v108
  %157 = vmatpush.msra.mxu0 %v104
  %158 = vmatpush.msra.mxu0 %v100
  %159 = vmatpush.msra.mxu0 %v96
  %160 = vmatpush.msra.mxu0 %v92
  %161 = vmatpush.msra.mxu0 %v88
  %162 = vmatpush.msra.mxu0 %v84
  %163 = vmatpush.msra.mxu0 %v80
  %164 = vmatpush.msra.mxu0 %v76
  %165 = vmatpush.msra.mxu0 %v72
  %166 = vmatpush.msra.mxu0 %v68
  %167 = vmatpush.msra.mxu0 %v64
  %168 = vmatpush.msra.mxu0 %v60
  %169 = vmatpush.msra.mxu0 %v56
  %170 = vmatpush.msra.mxu0 %v52
  %171 = vmatpush.msra.mxu0 %v48
  %172 = vmatmul.f32.gmra.mxu0 %v44
  %v173 = vpop.f32.mrf.mxu0
  %v174 = vadd.f32 0.0, %v173
  %175 = vmatmul.f32.gmra.mxu0 %v45
  %v176 = vpop.f32.mrf.mxu0
  %v177 = vadd.f32 0.0, %v176
  %178 = vdwg.mxu0
  %179 = vmatpush.msra.mxu0 %v109
  %180 = vmatpush.msra.mxu0 %v105
  %181 = vmatpush.msra.mxu0 %v101
  %182 = vmatpush.msra.mxu0 %v97
  %183 = vmatpush.msra.mxu0 %v93
  %184 = vmatpush.msra.mxu0 %v89
  %185 = vmatpush.msra.mxu0 %v85
  %186 = vmatpush.msra.mxu0 %v81
  %187 = vmatpush.msra.mxu0 %v77
  %188 = vmatpush.msra.mxu0 %v73
  %189 = vmatpush.msra.mxu0 %v69
  %190 = vmatpush.msra.mxu0 %v65
  %191 = vmatpush.msra.mxu0 %v61
  %192 = vmatpush.msra.mxu0 %v57
  %193 = vmatpush.msra.mxu0 %v53
  %194 = vmatpush.msra.mxu0 %v49
  %195 = vmatmul.f32.gmra.mxu0 %v44
  %v196 = vpop.f32.mrf.mxu0
  %v197 = vadd.f32 0.0, %v196
  %198 = vmatmul.f32.gmra.mxu0 %v45
  %v199 = vpop.f32.mrf.mxu0
  %v200 = vadd.f32 0.0, %v199
  %201 = vdwg.mxu0
  %v202 = vmul.f32 %v44, %v44
  %v203 = vmul.f32 %v45, %v45
  %204 = vadd.xlane.f32.xlu0 %v202
  %v205 = vpop.xlane.xlu0 %204
  %206 = vadd.xlane.f32.xlu0 %v203
  %v207 = vpop.xlane.xlu0 %206
  %v208 = vadd.f32 %v205, 1e-08
  %v209 = vadd.f32 %v207, 1e-08
  %v210 = vrsqrt.pop %v208
  %v211 = vmul.f32 %v210, %v208
  %v212 = vmul.f32 %v211, %v210
  %v213 = vmul.f32 0.5, %v212
  %v214 = vsub.f32 1.5, %v213
  %v215 = vmul.f32 %v210, %v214
  %vm216 = vweird.f32 %v208
  %vm217 = vweird.f32 %v210
  %vm218 = vmor %vm216, %vm217
  %v219 = vsel %vm218, %v210, %v215
  %v220 = vrsqrt.pop %v209
  %v221 = vmul.f32 %v220, %v209
  %v222 = vmul.f32 %v221, %v220
  %v223 = vmul.f32 0.5, %v222
  %v224 = vsub.f32 1.5, %v223
  %v225 = vmul.f32 %v220, %v224
  %vm226 = vweird.f32 %v209
  %vm227 = vweird.f32 %v220
  %vm228 = vmor %vm226, %vm227
  %v229 = vsel %vm228, %v220, %v225
  %v230 = vmul.f32 %v128, %v219
  %v231 = vmul.f32 %v131, %v229
  %v232 = vmul.f32 %v230, 1.442695
  %v233 = vpow.pop %v232
  %v234 = vmul.f32 %v231, 1.442695
  %v235 = vpow.pop %v234
  %238 = vrot.lane.b32.xlu0 %v233, 112
  %v239 = vpop.permute.xlu0 %238
  %240 = vrot.lane.b32.xlu0 %v235, 112
  %v241 = vpop.permute.xlu0 %240
  %vm244 = vcmask 31744
  %v245 = vsel %vm244, %v239, 0.0
  %246 = vadd.xlane.f32.xlu0 %v245
  %v247 = vpop.xlane.xlu0 %246
  %v248 = vsel %vm244, %v241, 0.0
  %249 = vadd.xlane.f32.xlu0 %v248
  %v250 = vpop.xlane.xlu0 %249
  %v251 = vrcp.pop %v247
  %v252 = vrcp.pop %v250
  %v253 = vmul.f32 %v247, %v251
  %v254 = vmul.f32 %v250, %v252
  %v255 = vsub.f32 2.0, %v253
  %v256 = vsub.f32 2.0, %v254
  %v257 = vmul.f32 %v251, %v255
  %v258 = vmul.f32 %v252, %v256
  %v259 = vmul.f32 %v233, %v257
  %v260 = vmul.f32 %v235, %v258
  %263 = vrot.lane.b32.xlu0 %v259, 112
  %v264 = vpop.permute.xlu0 %263
  %265 = vrot.lane.b32.xlu0 %v260, 112
  %v266 = vpop.permute.xlu0 %265
  %269 = vst.msk [vmem:[%s9] sm:$0xff] %vm244, %v264
  %270 = vst.msk [vmem:[%s9 + $0x8] sm:$0xff] %vm244, %v266
  %v271 = vld [vmem:[%s4] sm:$0x1]
  %v272 = vperm.slane %v271, 0
  %v273 = vadd.f32 %v128, %v272
  %v274 = vadd.f32 %v131, %v272
  %275 = vset.pattern.permute.xlu0 16
  %276 = vperm.xlu0 %275, %v259
  %v277 = vpop.permute.xlu0 %276
  %279 = vset.pattern.permute.xlu0 16
  %280 = vperm.xlu0 %279, %v260
  %v281 = vpop.permute.xlu0 %280
  %v283 = vmul.f32 %v277, %v273
  %v284 = vmul.f32 %v281, %v274
  %v285 = vld [vmem:[%s4 + $0x1] sm:$0x1]
  %v286 = vperm.slane %v285, 0
  %v287 = vadd.f32 %v151, %v286
  %v288 = vadd.f32 %v154, %v286
  %289 = vset.pattern.permute.xlu0 17
  %290 = vperm.xlu0 %289, %v259
  %v291 = vpop.permute.xlu0 %290
  %293 = vset.pattern.permute.xlu0 17
  %294 = vperm.xlu0 %293, %v260
  %v295 = vpop.permute.xlu0 %294
  %v297 = vmul.f32 %v291, %v287
  %v298 = vmul.f32 %v295, %v288
  %v299 = vadd.f32 %v283, %v297
  %v300 = vadd.f32 %v284, %v298
  %v301 = vld [vmem:[%s4 + $0x2] sm:$0x1]
  %v302 = vperm.slane %v301, 0
  %v303 = vadd.f32 %v174, %v302
  %v304 = vadd.f32 %v177, %v302
  %305 = vset.pattern.permute.xlu0 18
  %306 = vperm.xlu0 %305, %v259
  %v307 = vpop.permute.xlu0 %306
  %309 = vset.pattern.permute.xlu0 18
  %310 = vperm.xlu0 %309, %v260
  %v311 = vpop.permute.xlu0 %310
  %v313 = vmul.f32 %v307, %v303
  %v314 = vmul.f32 %v311, %v304
  %v315 = vadd.f32 %v299, %v313
  %v316 = vadd.f32 %v300, %v314
  %v317 = vld [vmem:[%s4 + $0x3] sm:$0x1]
  %v318 = vperm.slane %v317, 0
  %v319 = vadd.f32 %v197, %v318
  %v320 = vadd.f32 %v200, %v318
  %321 = vset.pattern.permute.xlu0 19
  %322 = vperm.xlu0 %321, %v259
  %v323 = vpop.permute.xlu0 %322
  %325 = vset.pattern.permute.xlu0 19
  %326 = vperm.xlu0 %325, %v260
  %v327 = vpop.permute.xlu0 %326
  %v329 = vmul.f32 %v323, %v319
  %v330 = vmul.f32 %v327, %v320
  %v331 = vadd.f32 %v315, %v329
  %v332 = vadd.f32 %v316, %v330
  %v333 = vld [vmem:[%s5] sm:$0x1]
  %v335 = vperm.slane %v333, 0
  %v337 = vmul.f32 %v331, %v335
  %v338 = vmul.f32 %v332, %v335
  %v339 = vmax.f32 %v337, 0.0
  %v340 = vmax.f32 %v338, 0.0
  %v341 = vld [vmem:[%s6] sm:$0xff]
  %v342 = vld [vmem:[%s6 + $0x8] sm:$0xff]
  %v343 = vld [vmem:[%s6 + $0x10] sm:$0xff]
  %v344 = vld [vmem:[%s6 + $0x18] sm:$0xff]
  %v345 = vld [vmem:[%s6 + $0x20] sm:$0xff]
  %v346 = vld [vmem:[%s6 + $0x28] sm:$0xff]
  %v347 = vld [vmem:[%s6 + $0x30] sm:$0xff]
  %v348 = vld [vmem:[%s6 + $0x38] sm:$0xff]
  %v349 = vld [vmem:[%s6 + $0x40] sm:$0xff]
  %v350 = vld [vmem:[%s6 + $0x48] sm:$0xff]
  %v351 = vld [vmem:[%s6 + $0x50] sm:$0xff]
  %v352 = vld [vmem:[%s6 + $0x58] sm:$0xff]
  %v353 = vld [vmem:[%s6 + $0x60] sm:$0xff]
  %v354 = vld [vmem:[%s6 + $0x68] sm:$0xff]
  %v355 = vld [vmem:[%s6 + $0x70] sm:$0xff]
  %v356 = vld [vmem:[%s6 + $0x78] sm:$0xff]
  %v357 = vld [vmem:[%s6 + $0x80] sm:$0xff]
  %v358 = vld [vmem:[%s6 + $0x88] sm:$0xff]
  %v359 = vld [vmem:[%s6 + $0x90] sm:$0xff]
  %v360 = vld [vmem:[%s6 + $0x98] sm:$0xff]
  %v361 = vld [vmem:[%s6 + $0xa0] sm:$0xff]
  %v362 = vld [vmem:[%s6 + $0xa8] sm:$0xff]
  %v363 = vld [vmem:[%s6 + $0xb0] sm:$0xff]
  %v364 = vld [vmem:[%s6 + $0xb8] sm:$0xff]
  %v365 = vld [vmem:[%s6 + $0xc0] sm:$0xff]
  %v366 = vld [vmem:[%s6 + $0xc8] sm:$0xff]
  %v367 = vld [vmem:[%s6 + $0xd0] sm:$0xff]
  %v368 = vld [vmem:[%s6 + $0xd8] sm:$0xff]
  %v369 = vld [vmem:[%s6 + $0xe0] sm:$0xff]
  %v370 = vld [vmem:[%s6 + $0xe8] sm:$0xff]
  %v371 = vld [vmem:[%s6 + $0xf0] sm:$0xff]
  %v372 = vld [vmem:[%s6 + $0xf8] sm:$0xff]
  %v373 = vld [vmem:[%s6 + $0x100] sm:$0xff]
  %v374 = vld [vmem:[%s6 + $0x108] sm:$0xff]
  %v375 = vld [vmem:[%s6 + $0x110] sm:$0xff]
  %v376 = vld [vmem:[%s6 + $0x118] sm:$0xff]
  %v377 = vld [vmem:[%s6 + $0x120] sm:$0xff]
  %v378 = vld [vmem:[%s6 + $0x128] sm:$0xff]
  %v379 = vld [vmem:[%s6 + $0x130] sm:$0xff]
  %v380 = vld [vmem:[%s6 + $0x138] sm:$0xff]
  %v381 = vld [vmem:[%s6 + $0x140] sm:$0xff]
  %v382 = vld [vmem:[%s6 + $0x148] sm:$0xff]
  %v383 = vld [vmem:[%s6 + $0x150] sm:$0xff]
  %v384 = vld [vmem:[%s6 + $0x158] sm:$0xff]
  %v385 = vld [vmem:[%s6 + $0x160] sm:$0xff]
  %v386 = vld [vmem:[%s6 + $0x168] sm:$0xff]
  %v387 = vld [vmem:[%s6 + $0x170] sm:$0xff]
  %v388 = vld [vmem:[%s6 + $0x178] sm:$0xff]
  %v389 = vld [vmem:[%s6 + $0x180] sm:$0xff]
  %v390 = vld [vmem:[%s6 + $0x188] sm:$0xff]
  %v391 = vld [vmem:[%s6 + $0x190] sm:$0xff]
  %v392 = vld [vmem:[%s6 + $0x198] sm:$0xff]
  %v393 = vld [vmem:[%s6 + $0x1a0] sm:$0xff]
  %v394 = vld [vmem:[%s6 + $0x1a8] sm:$0xff]
  %v395 = vld [vmem:[%s6 + $0x1b0] sm:$0xff]
  %v396 = vld [vmem:[%s6 + $0x1b8] sm:$0xff]
  %v397 = vld [vmem:[%s6 + $0x1c0] sm:$0xff]
  %v398 = vld [vmem:[%s6 + $0x1c8] sm:$0xff]
  %v399 = vld [vmem:[%s6 + $0x1d0] sm:$0xff]
  %v400 = vld [vmem:[%s6 + $0x1d8] sm:$0xff]
  %v401 = vld [vmem:[%s6 + $0x1e0] sm:$0xff]
  %v402 = vld [vmem:[%s6 + $0x1e8] sm:$0xff]
  %v403 = vld [vmem:[%s6 + $0x1f0] sm:$0xff]
  %v404 = vld [vmem:[%s6 + $0x1f8] sm:$0xff]
  %405 = vmatpush.msra.mxu0 %v401
  %406 = vmatpush.msra.mxu0 %v397
  %407 = vmatpush.msra.mxu0 %v393
  %408 = vmatpush.msra.mxu0 %v389
  %409 = vmatpush.msra.mxu0 %v385
  %410 = vmatpush.msra.mxu0 %v381
  %411 = vmatpush.msra.mxu0 %v377
  %412 = vmatpush.msra.mxu0 %v373
  %413 = vmatpush.msra.mxu0 %v369
  %414 = vmatpush.msra.mxu0 %v365
  %415 = vmatpush.msra.mxu0 %v361
  %416 = vmatpush.msra.mxu0 %v357
  %417 = vmatpush.msra.mxu0 %v353
  %418 = vmatpush.msra.mxu0 %v349
  %419 = vmatpush.msra.mxu0 %v345
  %420 = vmatpush.msra.mxu0 %v341
  %421 = vmatmul.f32.gmra.mxu0 %v339
  %v422 = vpop.f32.mrf.mxu0
  %v423 = vadd.f32 0.0, %v422
  %424 = vmatmul.f32.gmra.mxu0 %v340
  %v425 = vpop.f32.mrf.mxu0
  %v426 = vadd.f32 0.0, %v425
  %427 = vdwg.mxu0
  %428 = vmatpush.msra.mxu0 %v402
  %429 = vmatpush.msra.mxu0 %v398
  %430 = vmatpush.msra.mxu0 %v394
  %431 = vmatpush.msra.mxu0 %v390
  %432 = vmatpush.msra.mxu0 %v386
  %433 = vmatpush.msra.mxu0 %v382
  %434 = vmatpush.msra.mxu0 %v378
  %435 = vmatpush.msra.mxu0 %v374
  %436 = vmatpush.msra.mxu0 %v370
  %437 = vmatpush.msra.mxu0 %v366
  %438 = vmatpush.msra.mxu0 %v362
  %439 = vmatpush.msra.mxu0 %v358
  %440 = vmatpush.msra.mxu0 %v354
  %441 = vmatpush.msra.mxu0 %v350
  %442 = vmatpush.msra.mxu0 %v346
  %443 = vmatpush.msra.mxu0 %v342
  %444 = vmatmul.f32.gmra.mxu0 %v339
  %v445 = vpop.f32.mrf.mxu0
  %v446 = vadd.f32 0.0, %v445
  %447 = vmatmul.f32.gmra.mxu0 %v340
  %v448 = vpop.f32.mrf.mxu0
  %v449 = vadd.f32 0.0, %v448
  %450 = vdwg.mxu0
  %451 = vmatpush.msra.mxu0 %v403
  %452 = vmatpush.msra.mxu0 %v399
  %453 = vmatpush.msra.mxu0 %v395
  %454 = vmatpush.msra.mxu0 %v391
  %455 = vmatpush.msra.mxu0 %v387
  %456 = vmatpush.msra.mxu0 %v383
  %457 = vmatpush.msra.mxu0 %v379
  %458 = vmatpush.msra.mxu0 %v375
  %459 = vmatpush.msra.mxu0 %v371
  %460 = vmatpush.msra.mxu0 %v367
  %461 = vmatpush.msra.mxu0 %v363
  %462 = vmatpush.msra.mxu0 %v359
  %463 = vmatpush.msra.mxu0 %v355
  %464 = vmatpush.msra.mxu0 %v351
  %465 = vmatpush.msra.mxu0 %v347
  %466 = vmatpush.msra.mxu0 %v343
  %467 = vmatmul.f32.gmra.mxu0 %v339
  %v468 = vpop.f32.mrf.mxu0
  %v469 = vadd.f32 0.0, %v468
  %470 = vmatmul.f32.gmra.mxu0 %v340
  %v471 = vpop.f32.mrf.mxu0
  %v472 = vadd.f32 0.0, %v471
  %473 = vdwg.mxu0
  %474 = vmatpush.msra.mxu0 %v404
  %475 = vmatpush.msra.mxu0 %v400
  %476 = vmatpush.msra.mxu0 %v396
  %477 = vmatpush.msra.mxu0 %v392
  %478 = vmatpush.msra.mxu0 %v388
  %479 = vmatpush.msra.mxu0 %v384
  %480 = vmatpush.msra.mxu0 %v380
  %481 = vmatpush.msra.mxu0 %v376
  %482 = vmatpush.msra.mxu0 %v372
  %483 = vmatpush.msra.mxu0 %v368
  %484 = vmatpush.msra.mxu0 %v364
  %485 = vmatpush.msra.mxu0 %v360
  %486 = vmatpush.msra.mxu0 %v356
  %487 = vmatpush.msra.mxu0 %v352
  %488 = vmatpush.msra.mxu0 %v348
  %489 = vmatpush.msra.mxu0 %v344
  %490 = vmatmul.f32.gmra.mxu0 %v339
  %v491 = vpop.f32.mrf.mxu0
  %v492 = vadd.f32 0.0, %v491
  %493 = vmatmul.f32.gmra.mxu0 %v340
  %v494 = vpop.f32.mrf.mxu0
  %v495 = vadd.f32 0.0, %v494
  %496 = vdwg.mxu0
  %v497 = vmul.f32 %v339, %v339
  %v498 = vmul.f32 %v340, %v340
  %499 = vadd.xlane.f32.xlu0 %v497
  %v500 = vpop.xlane.xlu0 %499
  %501 = vadd.xlane.f32.xlu0 %v498
  %v502 = vpop.xlane.xlu0 %501
  %v503 = vadd.f32 %v500, 1e-08
  %v504 = vadd.f32 %v502, 1e-08
  %v505 = vrsqrt.pop %v503
  %v506 = vmul.f32 %v505, %v503
  %v507 = vmul.f32 %v506, %v505
  %v508 = vmul.f32 0.5, %v507
  %v509 = vsub.f32 1.5, %v508
  %v510 = vmul.f32 %v505, %v509
  %vm511 = vweird.f32 %v503
  %vm512 = vweird.f32 %v505
  %vm513 = vmor %vm511, %vm512
  %v514 = vsel %vm513, %v505, %v510
  %v515 = vrsqrt.pop %v504
  %v516 = vmul.f32 %v515, %v504
  %v517 = vmul.f32 %v516, %v515
  %v518 = vmul.f32 0.5, %v517
  %v519 = vsub.f32 1.5, %v518
  %v520 = vmul.f32 %v515, %v519
  %vm521 = vweird.f32 %v504
  %vm522 = vweird.f32 %v515
  %vm523 = vmor %vm521, %vm522
  %v524 = vsel %vm523, %v515, %v520
  %v525 = vmul.f32 %v423, %v514
  %v526 = vmul.f32 %v426, %v524
  %v527 = vmul.f32 %v525, 1.442695
  %v528 = vpow.pop %v527
  %v529 = vmul.f32 %v526, 1.442695
  %v530 = vpow.pop %v529
  %533 = vrot.lane.b32.xlu0 %v528, 96
  %v534 = vpop.permute.xlu0 %533
  %535 = vrot.lane.b32.xlu0 %v530, 96
  %v536 = vpop.permute.xlu0 %535
  %v539 = vsel %vm244, %v534, 0.0
  %540 = vadd.xlane.f32.xlu0 %v539
  %v541 = vpop.xlane.xlu0 %540
  %v542 = vsel %vm244, %v536, 0.0
  %543 = vadd.xlane.f32.xlu0 %v542
  %v544 = vpop.xlane.xlu0 %543
  %v545 = vrcp.pop %v541
  %v546 = vrcp.pop %v544
  %v547 = vmul.f32 %v541, %v545
  %v548 = vmul.f32 %v544, %v546
  %v549 = vsub.f32 2.0, %v547
  %v550 = vsub.f32 2.0, %v548
  %v551 = vmul.f32 %v545, %v549
  %v552 = vmul.f32 %v546, %v550
  %v553 = vmul.f32 %v528, %v551
  %v554 = vmul.f32 %v530, %v552
  %557 = vrot.lane.b32.xlu0 %v553, 96
  %v558 = vpop.permute.xlu0 %557
  %559 = vrot.lane.b32.xlu0 %v554, 96
  %v560 = vpop.permute.xlu0 %559
  %563 = vst.msk [vmem:[%s10] sm:$0xff] %vm244, %v558
  %564 = vst.msk [vmem:[%s10 + $0x8] sm:$0xff] %vm244, %v560
  %v565 = vld [vmem:[%s7] sm:$0x1]
  %v566 = vperm.slane %v565, 0
  %v567 = vadd.f32 %v423, %v566
  %v568 = vadd.f32 %v426, %v566
  %569 = vset.pattern.permute.xlu0 32
  %570 = vperm.xlu0 %569, %v553
  %v571 = vpop.permute.xlu0 %570
  %573 = vset.pattern.permute.xlu0 32
  %574 = vperm.xlu0 %573, %v554
  %v575 = vpop.permute.xlu0 %574
  %v577 = vmul.f32 %v571, %v567
  %v578 = vmul.f32 %v575, %v568
  %v579 = vld [vmem:[%s7 + $0x1] sm:$0x1]
  %v580 = vperm.slane %v579, 0
  %v581 = vadd.f32 %v446, %v580
  %v582 = vadd.f32 %v449, %v580
  %583 = vset.pattern.permute.xlu0 33
  %584 = vperm.xlu0 %583, %v553
  %v585 = vpop.permute.xlu0 %584
  %587 = vset.pattern.permute.xlu0 33
  %588 = vperm.xlu0 %587, %v554
  %v589 = vpop.permute.xlu0 %588
  %v591 = vmul.f32 %v585, %v581
  %v592 = vmul.f32 %v589, %v582
  %v593 = vadd.f32 %v577, %v591
  %v594 = vadd.f32 %v578, %v592
  %v595 = vld [vmem:[%s7 + $0x2] sm:$0x1]
  %v596 = vperm.slane %v595, 0
  %v597 = vadd.f32 %v469, %v596
  %v598 = vadd.f32 %v472, %v596
  %599 = vset.pattern.permute.xlu0 34
  %600 = vperm.xlu0 %599, %v553
  %v601 = vpop.permute.xlu0 %600
  %603 = vset.pattern.permute.xlu0 34
  %604 = vperm.xlu0 %603, %v554
  %v605 = vpop.permute.xlu0 %604
  %v607 = vmul.f32 %v601, %v597
  %v608 = vmul.f32 %v605, %v598
  %v609 = vadd.f32 %v593, %v607
  %v610 = vadd.f32 %v594, %v608
  %v611 = vld [vmem:[%s7 + $0x3] sm:$0x1]
  %v612 = vperm.slane %v611, 0
  %v613 = vadd.f32 %v492, %v612
  %v614 = vadd.f32 %v495, %v612
  %615 = vset.pattern.permute.xlu0 35
  %616 = vperm.xlu0 %615, %v553
  %v617 = vpop.permute.xlu0 %616
  %619 = vset.pattern.permute.xlu0 35
  %620 = vperm.xlu0 %619, %v554
  %v621 = vpop.permute.xlu0 %620
  %v623 = vmul.f32 %v617, %v613
  %v624 = vmul.f32 %v621, %v614
  %v625 = vadd.f32 %v609, %v623
  %v626 = vadd.f32 %v610, %v624
  %v627 = vadd.f32 %v32, %v625
  %v628 = vadd.f32 %v33, %v626
  %629 = vst [vmem:[%s8] sm:$0xff] %v627
  %630 = vst [vmem:[%s8 + $0x8] sm:$0xff] %v628
  // Predicated region
  $region34: #{pool_mixer_block.1} parent=0 // pred_check
    _
  $region35: #{pool_mixer_block.1} parent=0 // pred_check_branch
    %632 = sbr.rel (0) target = $region37
  $region36: #{pool_mixer_block.1} parent=0 // pred_region
    _
  $region37: #{pool_mixer_block.1} parent=0 // pred_fallthru
    _
  // Predicated region
  $region38: #{pool_mixer_block.1} parent=0 // pred_check
    _
  $region39: #{pool_mixer_block.1} parent=0 // pred_check_branch
    %634 = sbr.rel (0) target = $region41
  $region40: #{pool_mixer_block.1} parent=0 // pred_region
    _
  $region41: #{pool_mixer_block.1} parent=0 // pred_fallthru
    _
  // Predicated region
  $region42: #{pool_mixer_block.1} parent=0 // pred_check
    _
  $region43: #{pool_mixer_block.1} parent=0 // pred_check_branch
    %636 = sbr.rel (0) target = $region45
  $region44: #{pool_mixer_block.1} parent=0 // pred_region
    _
  $region45: #{pool_mixer_block.1} parent=0 // pred_fallthru
    _
  // Predicated region
  $region46: #{pool_mixer_block.1} parent=0 // pred_check
    _
  $region47: #{pool_mixer_block.1} parent=0 // pred_check_branch
    %638 = sbr.rel (0) target = $region49
  $region48: #{pool_mixer_block.1} parent=0 // pred_region
    _
  $region49: #{pool_mixer_block.1} parent=0 // pred_fallthru
    _
  // Predicated region
  $region50: #{pool_mixer_block.1} parent=0 // pred_check
    _
  $region51: #{pool_mixer_block.1} parent=0 // pred_check_branch
    %640 = sbr.rel (0) target = $region53
  $region52: #{pool_mixer_block.1} parent=0 // pred_region
    _
  $region53: #{pool_mixer_block.1} parent=0 // pred_fallthru
    _
  // Predicated region
  $region54: #{pool_mixer_block.1} parent=0 // pred_check
    _
  $region55: #{pool_mixer_block.1} parent=0 // pred_check_branch
    %642 = sbr.rel (0) target = $region57
  $region56: #{pool_mixer_block.1} parent=0 // pred_region
    _
  $region57: #{pool_mixer_block.1} parent=0 // pred_fallthru
    _

</llo_original>
